<compile_context>
chip_gen: v7x
topology: tpu7x:2x2x1
jax: 0.10.0
libtpu: 0.0.40
codegen_flags: <defaults>
</compile_context>

<pallas_src>
import jax
import jax.numpy as jnp
import numpy as np
from jax import lax
from jax.experimental import pallas as pl
from jax.experimental.pallas import tpu as pltpu

POOL = 4  # nn.AvgPool2d(4)


def _l_spa_kernel(sh_ref, swt_ref, al_ref, ar_ref, bu_ref, bd_ref,
                  org_ref, enh_ref, e_ref, t_ref):
    """One grid step processes a block of bn images.

    sh_ref : (Hp, C*H)   channel-mean + row-pool matrix    (resident constant)
    swt_ref: (W, Wp)     column-pool matrix                (resident constant)
    al/ar  : (Wp, Wp)    left/right difference matrices    (resident constants)
    bu/bd  : (Hp, Hp)    up/down difference matrices       (resident constants)
    org_ref, enh_ref: (bn*C*H, W) flattened image blocks (native dtype)
    e_ref  : (bn, Hp, Wp) output block
    t_ref  : (bn*C*H, Wp) f32 scratch holding the column-pooled delta
    """
    f32 = jnp.float32
    bn, hp, wp = e_ref.shape
    ch = sh_ref.shape[1]

    # Linearity: one pass over the difference image (cast to f32 on the VPU).
    delta = org_ref[...].astype(f32) - enh_ref[...].astype(f32)            # (bn*ch, W)
    # Column pool of the whole batch block in a single MXU matmul.
    t_ref[...] = jnp.dot(delta, swt_ref[...], preferred_element_type=f32)  # (bn*ch, Wp)

    # Load resident constants once (hoisted out of the per-image loop).
    sh = sh_ref[...]
    a_l = al_ref[...]
    a_r = ar_ref[...]
    b_u = bu_ref[...]
    b_d = bd_ref[...]

    def body(bi, carry):
        t_i = t_ref[pl.ds(bi * ch, ch), :]                                 # (ch, Wp)
        # Channel mean + row pool on the 4x-smaller pooled data.
        pooled = jnp.dot(sh, t_i, preferred_element_type=f32)              # (Hp, Wp)
        # Fixed 3x3 directional convs (zero padding=1) as bidiagonal matmuls.
        d_l = jnp.dot(pooled, a_l, preferred_element_type=f32)             # x - x[:, j-1]
        d_r = jnp.dot(pooled, a_r, preferred_element_type=f32)             # x - x[:, j+1]
        d_u = jnp.dot(b_u, pooled, preferred_element_type=f32)             # x - x[i-1, :]
        d_d = jnp.dot(b_d, pooled, preferred_element_type=f32)             # x - x[i+1, :]
        e_ref[bi] = (d_l * d_l + d_r * d_r + d_u * d_u
                     + d_d * d_d).astype(e_ref.dtype)
        return carry

    lax.fori_loop(0, bn, body, 0, unroll=bn <= 8)


def _constant_matrices(c, h, w):
    """Build the constant pooling / difference matrices once (host side)."""
    hp, wp = h // POOL, w // POOL
    # Sh: (Hp, C*H) — combined channel-mean + row-pool, entries 1/(C*POOL).
    row_sel = ((np.arange(h) // POOL)[None, :] == np.arange(hp)[:, None])
    sh = np.tile(row_sel, (1, c)).astype(np.float32) / float(c * POOL)
    # SwT: (W, Wp) — column pool, entries 1/POOL.
    swt = ((np.arange(w) // POOL)[:, None]
           == np.arange(wp)[None, :]).astype(np.float32) / float(POOL)
    # Bidiagonal difference matrices == the module's fixed zero-padded 3x3 convs:
    #   pooled @ A_left  -> x[i,j]-x[i,j-1]     pooled @ A_right -> x[i,j]-x[i,j+1]
    #   B_up   @ pooled  -> x[i,j]-x[i-1,j]     B_down @ pooled  -> x[i,j]-x[i+1,j]
    r = np.arange(wp)[:, None]
    cc = np.arange(wp)[None, :]
    a_left = (r == cc).astype(np.float32) - (r == cc - 1).astype(np.float32)
    a_right = (r == cc).astype(np.float32) - (r == cc + 1).astype(np.float32)
    r = np.arange(hp)[:, None]
    cc = np.arange(hp)[None, :]
    b_up = (r == cc).astype(np.float32) - (r == cc + 1).astype(np.float32)
    b_down = (r == cc).astype(np.float32) - (r == cc - 1).astype(np.float32)
    return (jnp.asarray(sh), jnp.asarray(swt), jnp.asarray(a_left),
            jnp.asarray(a_right), jnp.asarray(b_up), jnp.asarray(b_down))


def _vmem_capacity_bytes():
    """Physical per-core VMEM, with a conservative (v7x-sized) fallback."""
    try:
        info = pltpu.get_tpu_info()
        cap = getattr(info, "vmem_capacity_bytes", None)
        if cap:
            return int(cap)
    except Exception:
        pass
    return 64 * 1024 * 1024


def _pick_batch_block(n, ch, per_bn_bytes, fixed_bytes, vmem_cap):
    """Largest divisor of n whose per-step footprint fits ~50% of VMEM.

    Also keeps >= 2 grid steps (when n >= 2) so the 'parallel' batch axis can
    be sharded across v7x's two TensorCores, and prefers bn*ch % 8 == 0 so the
    (bn*C*H, W) block keeps a sublane-aligned second-minor dim.
    """
    budget = max(vmem_cap // 2 - fixed_bytes, per_bn_bytes)
    max_bn = max(1, budget // per_bn_bytes)
    if n >= 2:
        max_bn = min(max_bn, n // 2)
    max_bn = int(min(max_bn, n))
    divisors = [bn for bn in range(max_bn, 0, -1) if n % bn == 0]
    for bn in divisors:
        if (bn * ch) % 8 == 0 or bn == n:
            return bn
    return divisors[0] if divisors else 1


def l_spa(org, enhance):
    """Pallas implementation of L_spa.forward. org/enhance: (N, C, H, W)."""
    n, c, h, w = org.shape
    assert enhance.shape == org.shape
    assert h % POOL == 0 and w % POOL == 0
    hp, wp = h // POOL, w // POOL
    ch = c * h

    sh, swt, a_l, a_r, b_u, b_d = _constant_matrices(c, h, w)

    # --- generation-aware block sizing (kernel is HBM/DMA bound) -------------
    vmem_cap = _vmem_capacity_bytes()
    in_isz = org.dtype.itemsize + enhance.dtype.itemsize
    # Resident constants (double-buffered, no pipeline_mode override) + small
    # per-iteration temporaries.
    fixed_bytes = 2 * 4 * (hp * ch + w * wp + 2 * wp * wp + 2 * hp * hp)
    fixed_bytes += 8 * hp * wp * 4
    # Per-image cost: org+enh blocks (double-buffered, native dtype), output
    # block (double-buffered), in-kernel f32 delta, column-pooled scratch.
    per_bn_bytes = (2 * ch * w * in_isz
                    + 2 * hp * wp * 4
                    + ch * w * 4
                    + ch * wp * 4)
    bn = _pick_batch_block(n, ch, per_bn_bytes, fixed_bytes, vmem_cap)

    est = fixed_bytes + bn * per_bn_bytes
    # Unconditional (v5e default is 16 MiB); ~1.5x headroom, capped at 75% of
    # physical VMEM (~48 MiB on v7x, ~96 MiB on v5e/v6e).
    vmem_limit = int(min(max(est * 3 // 2, 32 * 1024 * 1024),
                         int(0.75 * vmem_cap)))
    # TODO(synk): for images whose per-image working set exceeds ~75% of VMEM,
    # add an H-tiling grid axis (with a 1-row pooled halo for the up/down
    # diffs) instead of relying on a single huge block.

    # Flat (N*C*H, W) layout: free HBM reshape, contiguous per-step DMA, and
    # the big column-pool matmul needs no in-kernel reshape.  W < 128 (or not
    # a multiple of 128) simply pays lane padding; output stores with Wp < 128
    # are masked — both accepted (output is ~1-2% of input bytes).
    org2 = org.reshape(n * ch, w)
    enh2 = enhance.reshape(n * ch, w)

    out = pl.pallas_call(
        _l_spa_kernel,
        out_shape=jax.ShapeDtypeStruct((n, hp, wp), jnp.float32),
        grid_spec=pltpu.PrefetchScalarGridSpec(
            num_scalar_prefetch=0,
            grid=(n // bn,),
            in_specs=[
                # Constants: same block every step -> stay resident in VMEM.
                pl.BlockSpec((hp, ch), lambda i: (0, 0)),
                pl.BlockSpec((w, wp), lambda i: (0, 0)),
                pl.BlockSpec((wp, wp), lambda i: (0, 0)),
                pl.BlockSpec((wp, wp), lambda i: (0, 0)),
                pl.BlockSpec((hp, hp), lambda i: (0, 0)),
                pl.BlockSpec((hp, hp), lambda i: (0, 0)),
                # Image blocks: bn flattened images per grid step.
                pl.BlockSpec((bn * ch, w), lambda i: (i, 0)),
                pl.BlockSpec((bn * ch, w), lambda i: (i, 0)),
            ],
            out_specs=pl.BlockSpec((bn, hp, wp), lambda i: (i, 0, 0)),
            scratch_shapes=[pltpu.VMEM((bn * ch, wp), jnp.float32)],
        ),
        compiler_params=pltpu.CompilerParams(
            dimension_semantics=("parallel",),
            vmem_limit_bytes=vmem_limit),
    )(sh, swt, a_l, a_r, b_u, b_d, org2, enh2)

    return out.reshape(n, 1, hp, wp)


def _ref_l_spa(org, enh):
    """Pure-JAX reference mirroring the PyTorch forward (for validation)."""
    b, c, h, w = org.shape
    om = jnp.mean(org, axis=1, keepdims=True)
    em = jnp.mean(enh, axis=1, keepdims=True)

    def pool(x):
        return x.reshape(b, 1, h // POOL, POOL, w // POOL, POOL).mean(axis=(3, 5))

    op, ep = pool(om), pool(em)

    def dirs(x):
        xp = jnp.pad(x, ((0, 0), (0, 0), (1, 1), (1, 1)))
        cen = xp[:, :, 1:-1, 1:-1]
        left = cen - xp[:, :, 1:-1, :-2]
        right = cen - xp[:, :, 1:-1, 2:]
        up = cen - xp[:, :, :-2, 1:-1]
        down = cen - xp[:, :, 2:, 1:-1]
        return left, right, up, down

    do = dirs(op)
    de = dirs(ep)
    return sum((a - b_) ** 2 for a, b_ in zip(do, de))


if __name__ == "__main__":
    key = jax.random.PRNGKey(0)
    k1, k2 = jax.random.split(key)
    org = jax.random.uniform(k1, (2, 4, 16, 16), dtype=jnp.float32)
    enhance = jax.random.uniform(k2, (2, 4, 16, 16), dtype=jnp.float32)

    out = jax.block_until_ready(l_spa(org, enhance))
    ref = jax.block_until_ready(_ref_l_spa(org, enhance))

    assert out.shape == (2, 1, 4, 4), out.shape
    np.testing.assert_allclose(np.asarray(out), np.asarray(ref),
                               rtol=1e-5, atol=1e-5)
    print("KERNEL_OK")
</pallas_src>

<mosaic_0001>
module attributes {stable_mosaic.version = 11 : i64} {
  func.func @_l_spa_kernel(%arg0: i32, %arg1: memref<4x64xf32, #tpu.memory_space<vmem>>, %arg2: memref<16x4xf32, #tpu.memory_space<vmem>>, %arg3: memref<4x4xf32, #tpu.memory_space<vmem>>, %arg4: memref<4x4xf32, #tpu.memory_space<vmem>>, %arg5: memref<4x4xf32, #tpu.memory_space<vmem>>, %arg6: memref<4x4xf32, #tpu.memory_space<vmem>>, %arg7: memref<64x16xf32, #tpu.memory_space<vmem>>, %arg8: memref<64x16xf32, #tpu.memory_space<vmem>>, %arg9: memref<1x4x4xf32, #tpu.memory_space<vmem>>, %arg10: memref<64x4xf32, #tpu.memory_space<vmem>>) attributes {dimension_semantics = [#tpu.dimension_semantics<parallel>], iteration_bounds = array<i64: 2>, scalar_prefetch = 0 : i64, scratch_operands = 1 : i64, tpu.core_type = #tpu.core_type<tc>, window_params = [{pipeline_mode = #tpu.pipeline_mode<synchronous>, transform_indices = @transform_0, window_bounds = array<i64: 4, 64>}, {pipeline_mode = #tpu.pipeline_mode<synchronous>, transform_indices = @transform_1, window_bounds = array<i64: 16, 4>}, {pipeline_mode = #tpu.pipeline_mode<synchronous>, transform_indices = @transform_2, window_bounds = array<i64: 4, 4>}, {pipeline_mode = #tpu.pipeline_mode<synchronous>, transform_indices = @transform_3, window_bounds = array<i64: 4, 4>}, {pipeline_mode = #tpu.pipeline_mode<synchronous>, transform_indices = @transform_4, window_bounds = array<i64: 4, 4>}, {pipeline_mode = #tpu.pipeline_mode<synchronous>, transform_indices = @transform_5, window_bounds = array<i64: 4, 4>}, {transform_indices = @transform_6, window_bounds = array<i64: 64, 16>}, {transform_indices = @transform_7, window_bounds = array<i64: 64, 16>}, {transform_indices = @transform_8, window_bounds = array<i64: 1, 4, 4>}]} {
    %c0 = arith.constant 0 : index
    %c0_0 = arith.constant 0 : index
    %0 = vector.load %arg7[%c0, %c0_0] : memref<64x16xf32, #tpu.memory_space<vmem>>, vector<64x16xf32>
    %c0_1 = arith.constant 0 : index
    %c0_2 = arith.constant 0 : index
    %1 = vector.load %arg8[%c0_1, %c0_2] : memref<64x16xf32, #tpu.memory_space<vmem>>, vector<64x16xf32>
    %2 = arith.subf %0, %1 : vector<64x16xf32>
    %c0_3 = arith.constant 0 : index
    %c0_4 = arith.constant 0 : index
    %3 = vector.load %arg2[%c0_3, %c0_4] : memref<16x4xf32, #tpu.memory_space<vmem>>, vector<16x4xf32>
    %cst = arith.constant dense<0.000000e+00> : vector<64x4xf32>
    %4 = tpu.matmul %2, %3, %cst {dimension_numbers = #tpu.dot_dimension_numbers<[1], [0], [0], [1], [0, 0, 1, 1], [], []>} : vector<64x16xf32>, vector<16x4xf32>, vector<64x4xf32> -> vector<64x4xf32>
    %c0_5 = arith.constant 0 : index
    %c0_6 = arith.constant 0 : index
    %5 = vector.load %arg10[%c0_5, %c0_6] : memref<64x4xf32, #tpu.memory_space<vmem>>, vector<64x4xf32>
    tpu.vector_store %arg10[%c0_5, %c0_6], %4 {strides = array<i32>} : memref<64x4xf32, #tpu.memory_space<vmem>>, vector<64x4xf32>,
    %c0_7 = arith.constant 0 : index
    %c0_8 = arith.constant 0 : index
    %6 = vector.load %arg1[%c0_7, %c0_8] : memref<4x64xf32, #tpu.memory_space<vmem>>, vector<4x64xf32>
    %c0_9 = arith.constant 0 : index
    %c0_10 = arith.constant 0 : index
    %7 = vector.load %arg3[%c0_9, %c0_10] : memref<4x4xf32, #tpu.memory_space<vmem>>, vector<4x4xf32>
    %c0_11 = arith.constant 0 : index
    %c0_12 = arith.constant 0 : index
    %8 = vector.load %arg4[%c0_11, %c0_12] : memref<4x4xf32, #tpu.memory_space<vmem>>, vector<4x4xf32>
    %c0_13 = arith.constant 0 : index
    %c0_14 = arith.constant 0 : index
    %9 = vector.load %arg5[%c0_13, %c0_14] : memref<4x4xf32, #tpu.memory_space<vmem>>, vector<4x4xf32>
    %c0_15 = arith.constant 0 : index
    %c0_16 = arith.constant 0 : index
    %10 = vector.load %arg6[%c0_15, %c0_16] : memref<4x4xf32, #tpu.memory_space<vmem>>, vector<4x4xf32>
    %c0_i32 = arith.constant 0 : i32
    %c64_i32 = arith.constant 64 : i32
    %11 = arith.muli %c0_i32, %c64_i32 : i32
    %12 = arith.index_cast %11 : i32 to index
    %c0_17 = arith.constant 0 : index
    %13 = vector.load %arg10[%12, %c0_17] : memref<64x4xf32, #tpu.memory_space<vmem>>, vector<64x4xf32>
    %cst_18 = arith.constant dense<0.000000e+00> : vector<4x4xf32>
    %14 = tpu.matmul %6, %13, %cst_18 {dimension_numbers = #tpu.dot_dimension_numbers<[1], [0], [0], [1], [0, 0, 1, 1], [], []>} : vector<4x64xf32>, vector<64x4xf32>, vector<4x4xf32> -> vector<4x4xf32>
    %cst_19 = arith.constant dense<0.000000e+00> : vector<4x4xf32>
    %15 = tpu.matmul %14, %7, %cst_19 {dimension_numbers = #tpu.dot_dimension_numbers<[1], [0], [0], [1], [0, 0, 1, 1], [], []>} : vector<4x4xf32>, vector<4x4xf32>, vector<4x4xf32> -> vector<4x4xf32>
    %cst_20 = arith.constant dense<0.000000e+00> : vector<4x4xf32>
    %16 = tpu.matmul %14, %8, %cst_20 {dimension_numbers = #tpu.dot_dimension_numbers<[1], [0], [0], [1], [0, 0, 1, 1], [], []>} : vector<4x4xf32>, vector<4x4xf32>, vector<4x4xf32> -> vector<4x4xf32>
    %cst_21 = arith.constant dense<0.000000e+00> : vector<4x4xf32>
    %17 = tpu.matmul %9, %14, %cst_21 {dimension_numbers = #tpu.dot_dimension_numbers<[1], [0], [0], [1], [0, 0, 1, 1], [], []>} : vector<4x4xf32>, vector<4x4xf32>, vector<4x4xf32> -> vector<4x4xf32>
    %cst_22 = arith.constant dense<0.000000e+00> : vector<4x4xf32>
    %18 = tpu.matmul %10, %14, %cst_22 {dimension_numbers = #tpu.dot_dimension_numbers<[1], [0], [0], [1], [0, 0, 1, 1], [], []>} : vector<4x4xf32>, vector<4x4xf32>, vector<4x4xf32> -> vector<4x4xf32>
    %19 = arith.mulf %15, %15 : vector<4x4xf32>
    %20 = arith.mulf %16, %16 : vector<4x4xf32>
    %21 = arith.addf %19, %20 : vector<4x4xf32>
    %22 = arith.mulf %17, %17 : vector<4x4xf32>
    %23 = arith.addf %21, %22 : vector<4x4xf32>
    %24 = arith.mulf %18, %18 : vector<4x4xf32>
    %25 = arith.addf %23, %24 : vector<4x4xf32>
    %26 = arith.index_cast %c0_i32 : i32 to index
    %c0_23 = arith.constant 0 : index
    %c0_24 = arith.constant 0 : index
    %27 = vector.load %arg9[%26, %c0_23, %c0_24] : memref<1x4x4xf32, #tpu.memory_space<vmem>>, vector<1x4x4xf32>
    %28 = vector.shape_cast %27 : vector<1x4x4xf32> to vector<4x4xf32>
    %29 = vector.shape_cast %25 : vector<4x4xf32> to vector<1x4x4xf32>
    tpu.vector_store %arg9[%26, %c0_23, %c0_24], %29 {strides = array<i32>} : memref<1x4x4xf32, #tpu.memory_space<vmem>>, vector<1x4x4xf32>,
    %c1_i32 = arith.constant 1 : i32
    return
  }
  func.func @transform_0(%arg0: i32) -> (i32, i32) {
    %c0_i32 = arith.constant 0 : i32
    %c0_i32_0 = arith.constant 0 : i32
    %c0_i32_1 = arith.constant 0 : i32
    return %c0_i32, %c0_i32_0 : i32, i32
  }
  func.func @transform_1(%arg0: i32) -> (i32, i32) {
    %c0_i32 = arith.constant 0 : i32
    %c0_i32_0 = arith.constant 0 : i32
    %c0_i32_1 = arith.constant 0 : i32
    return %c0_i32, %c0_i32_0 : i32, i32
  }
  func.func @transform_2(%arg0: i32) -> (i32, i32) {
    %c0_i32 = arith.constant 0 : i32
    %c0_i32_0 = arith.constant 0 : i32
    %c0_i32_1 = arith.constant 0 : i32
    return %c0_i32, %c0_i32_0 : i32, i32
  }
  func.func @transform_3(%arg0: i32) -> (i32, i32) {
    %c0_i32 = arith.constant 0 : i32
    %c0_i32_0 = arith.constant 0 : i32
    %c0_i32_1 = arith.constant 0 : i32
    return %c0_i32, %c0_i32_0 : i32, i32
  }
  func.func @transform_4(%arg0: i32) -> (i32, i32) {
    %c0_i32 = arith.constant 0 : i32
    %c0_i32_0 = arith.constant 0 : i32
    %c0_i32_1 = arith.constant 0 : i32
    return %c0_i32, %c0_i32_0 : i32, i32
  }
  func.func @transform_5(%arg0: i32) -> (i32, i32) {
    %c0_i32 = arith.constant 0 : i32
    %c0_i32_0 = arith.constant 0 : i32
    %c0_i32_1 = arith.constant 0 : i32
    return %c0_i32, %c0_i32_0 : i32, i32
  }
  func.func @transform_6(%arg0: i32) -> (i32, i32) {
    %c0_i32 = arith.constant 0 : i32
    %c0_i32_0 = arith.constant 0 : i32
    return %arg0, %c0_i32 : i32, i32
  }
  func.func @transform_7(%arg0: i32) -> (i32, i32) {
    %c0_i32 = arith.constant 0 : i32
    %c0_i32_0 = arith.constant 0 : i32
    return %arg0, %c0_i32 : i32, i32
  }
  func.func @transform_8(%arg0: i32) -> (i32, i32, i32) {
    %c0_i32 = arith.constant 0 : i32
    %c0_i32_0 = arith.constant 0 : i32
    %c0_i32_1 = arith.constant 0 : i32
    return %arg0, %c0_i32, %c0_i32_0 : i32, i32, i32
  }
}

</mosaic_0001>

<llo_original>
// kernel: tpu_custom_call.1
$region0: #{tpu_custom_call.1}
  #allocation0 [shape = 'u32[]', space=smem, size = 0x4, offset = 0x4, fixed_abs, tag = 'smem constant byte address 0x4 - core index']
  #allocation1 [shape = 'u32[144,128]{1,0:T(1,128)}', space=vmem, size = 0x12000, scoped, tag = 'internal scratch']
  #allocation2 [shape = 'f32[64,4]{1,0:T(8,128)}', space=vmem, size = 0x8000, scoped, tag = 'scratch operand']
  %s0 = inlined_call_operand.vmem [shape: f32[4,64], index: 0, kind: input, shape index: {}]
  %s1 = inlined_call_operand.vmem [shape: f32[16,4], index: 1, kind: input, shape index: {}]
  %s2 = inlined_call_operand.vmem [shape: f32[4,4], index: 2, kind: input, shape index: {}]
  %s3 = inlined_call_operand.vmem [shape: f32[4,4], index: 3, kind: input, shape index: {}]
  %s4 = inlined_call_operand.vmem [shape: f32[4,4], index: 4, kind: input, shape index: {}]
  %s5 = inlined_call_operand.vmem [shape: f32[4,4], index: 5, kind: input, shape index: {}]
  %s6 = inlined_call_operand.vmem [shape: f32[128,16], index: 6, kind: input, shape index: {}]
  %s7 = inlined_call_operand.vmem [shape: f32[128,16], index: 7, kind: input, shape index: {}]
  %s8 = inlined_call_operand.hbm [shape: f32[2,4,4], index: 8, kind: output, shape index: {}]
  %s9 = sld [smem:[#allocation0]]
  $region65: #{tpu_custom_call.1} parent=0
    _
  %s11 = ssub.s32 1, %s9
  %s12 = scalar_select 0, %s11, %s9
  $region1: #{tpu_custom_call.1} parent=0
    #allocation3 [shape = 'u8[4096]{0}', space=vmem, size = 0x1000, scoped, tag = 'output window, operand 0']
    #allocation4 [shape = 's32[2]{0}', space=sflag, size = 0x8, scoped, tag = 'scoped memory for tpu_custom_call.1']
    %13 = vsyncpa [#allocation4], 0
    %s14 = scalar_lea.sflag [#allocation4], 1
    %15 = vsyncpa %s14, 0
    loop: start=0, step=1, limit=4
    $region2: #{tpu_custom_call.1} parent=1 // loop_pre_header
      _
    $region3: #{tpu_custom_call.1} parent=1 // loop_header
      %s17 = sphi 0, %s21
      %p18 = scmp.ge.s32.totalorder %s17, 4
      %s25 = sphi 0, %s25
      %s27 = sphi 0, %s25
      %s28 = sphi 0, %s27
      %s42 = sphi 0, %s28
      %s46 = sphi 0, %s46
      %s48 = sphi 0, %s46
      %s49 = sphi 0, %s48
      %s63 = sphi 0, %s49
      %s67 = sphi 0, %s67
      %s69 = sphi 0, %s67
      %s70 = sphi 0, %s69
      %s84 = sphi 0, %s70
      %s88 = sphi 0, %s88
      %s90 = sphi 0, %s88
      %s91 = sphi 0, %s90
      %s105 = sphi 0, %s91
      %s109 = sphi 0, %s109
      %s111 = sphi 0, %s109
      %s112 = sphi 0, %s111
      %s126 = sphi 0, %s112
      %s130 = sphi 0, %s130
      %s132 = sphi 0, %s130
      %s133 = sphi 0, %s132
      %s147 = sphi 0, %s133
      %s153 = sphi 0, %s155
      %s156 = sphi 0, %s153
      %s157 = sphi 0, %s156
      %s173 = sphi 0, %s157
      %s179 = sphi 0, %s181
      %s182 = sphi 0, %s179
      %s183 = sphi 0, %s182
      %s199 = sphi 0, %s183
      %s205 = sphi 0, %s207
      %s208 = sphi 0, %s205
      %s209 = sphi 0, %s208
      %s225 = sphi 0, %s209
    $region4: #{tpu_custom_call.1} parent=1 // loop_header_branch
      %20 = sbr.rel (%p18) target = $region8
    $region5: #{tpu_custom_call.1} parent=1 // loop_body
      %s22 = ssub.s32 %s17, 1
      %s23 = ssub.s32 %s17, 2
      %s24 = sadd.s32 %s17, 1
      %s26 = sadd.s32 %s25, 1
      %p29 = scmp.eq.s32.totalorder %s17, 1
      %p30 = scmp.ne.s32.totalorder %s25, %s27
      %p31 = scmp.eq.s32.totalorder %s17, 0
      %p32 = por %p30, %p31
      %p33 = scmp.ne.s32.totalorder %s25, %s27
      %p34 = scmp.eq.s32.totalorder %s22, 1
      %p35 = por %p33, %p34
      %p36 = scmp.ne.s32.totalorder %s27, %s28
      %p37 = scmp.eq.s32.totalorder %s22, 0
      %p38 = por %p36, %p37
      %p39 = scmp.ne.s32.totalorder %s27, %s28
      %p40 = scmp.eq.s32.totalorder %s23, 1
      %p41 = por %p39, %p40
      %p43 = scmp.ne.s32.totalorder %s28, %s42
      %p44 = scmp.eq.s32.totalorder %s23, 0
      %p45 = por %p43, %p44
      %s47 = sadd.s32 %s46, 1
      %p50 = scmp.eq.s32.totalorder %s17, 1
      %p51 = scmp.ne.s32.totalorder %s46, %s48
      %p52 = scmp.eq.s32.totalorder %s17, 0
      %p53 = por %p51, %p52
      %p54 = scmp.ne.s32.totalorder %s46, %s48
      %p55 = scmp.eq.s32.totalorder %s22, 1
      %p56 = por %p54, %p55
      %p57 = scmp.ne.s32.totalorder %s48, %s49
      %p58 = scmp.eq.s32.totalorder %s22, 0
      %p59 = por %p57, %p58
      %p60 = scmp.ne.s32.totalorder %s48, %s49
      %p61 = scmp.eq.s32.totalorder %s23, 1
      %p62 = por %p60, %p61
      %p64 = scmp.ne.s32.totalorder %s49, %s63
      %p65 = scmp.eq.s32.totalorder %s23, 0
      %p66 = por %p64, %p65
      %s68 = sadd.s32 %s67, 1
      %p71 = scmp.eq.s32.totalorder %s17, 1
      %p72 = scmp.ne.s32.totalorder %s67, %s69
      %p73 = scmp.eq.s32.totalorder %s17, 0
      %p74 = por %p72, %p73
      %p75 = scmp.ne.s32.totalorder %s67, %s69
      %p76 = scmp.eq.s32.totalorder %s22, 1
      %p77 = por %p75, %p76
      %p78 = scmp.ne.s32.totalorder %s69, %s70
      %p79 = scmp.eq.s32.totalorder %s22, 0
      %p80 = por %p78, %p79
      %p81 = scmp.ne.s32.totalorder %s69, %s70
      %p82 = scmp.eq.s32.totalorder %s23, 1
      %p83 = por %p81, %p82
      %p85 = scmp.ne.s32.totalorder %s70, %s84
      %p86 = scmp.eq.s32.totalorder %s23, 0
      %p87 = por %p85, %p86
      %s89 = sadd.s32 %s88, 1
      %p92 = scmp.eq.s32.totalorder %s17, 1
      %p93 = scmp.ne.s32.totalorder %s88, %s90
      %p94 = scmp.eq.s32.totalorder %s17, 0
      %p95 = por %p93, %p94
      %p96 = scmp.ne.s32.totalorder %s88, %s90
      %p97 = scmp.eq.s32.totalorder %s22, 1
      %p98 = por %p96, %p97
      %p99 = scmp.ne.s32.totalorder %s90, %s91
      %p100 = scmp.eq.s32.totalorder %s22, 0
      %p101 = por %p99, %p100
      %p102 = scmp.ne.s32.totalorder %s90, %s91
      %p103 = scmp.eq.s32.totalorder %s23, 1
      %p104 = por %p102, %p103
      %p106 = scmp.ne.s32.totalorder %s91, %s105
      %p107 = scmp.eq.s32.totalorder %s23, 0
      %p108 = por %p106, %p107
      %s110 = sadd.s32 %s109, 1
      %p113 = scmp.eq.s32.totalorder %s17, 1
      %p114 = scmp.ne.s32.totalorder %s109, %s111
      %p115 = scmp.eq.s32.totalorder %s17, 0
      %p116 = por %p114, %p115
      %p117 = scmp.ne.s32.totalorder %s109, %s111
      %p118 = scmp.eq.s32.totalorder %s22, 1
      %p119 = por %p117, %p118
      %p120 = scmp.ne.s32.totalorder %s111, %s112
      %p121 = scmp.eq.s32.totalorder %s22, 0
      %p122 = por %p120, %p121
      %p123 = scmp.ne.s32.totalorder %s111, %s112
      %p124 = scmp.eq.s32.totalorder %s23, 1
      %p125 = por %p123, %p124
      %p127 = scmp.ne.s32.totalorder %s112, %s126
      %p128 = scmp.eq.s32.totalorder %s23, 0
      %p129 = por %p127, %p128
      %s131 = sadd.s32 %s130, 1
      %p134 = scmp.eq.s32.totalorder %s17, 1
      %p135 = scmp.ne.s32.totalorder %s130, %s132
      %p136 = scmp.eq.s32.totalorder %s17, 0
      %p137 = por %p135, %p136
      %p138 = scmp.ne.s32.totalorder %s130, %s132
      %p139 = scmp.eq.s32.totalorder %s22, 1
      %p140 = por %p138, %p139
      %p141 = scmp.ne.s32.totalorder %s132, %s133
      %p142 = scmp.eq.s32.totalorder %s22, 0
      %p143 = por %p141, %p142
      %p144 = scmp.ne.s32.totalorder %s132, %s133
      %p145 = scmp.eq.s32.totalorder %s23, 1
      %p146 = por %p144, %p145
      %p148 = scmp.ne.s32.totalorder %s133, %s147
      %p149 = scmp.eq.s32.totalorder %s23, 0
      %p150 = por %p148, %p149
      %s151 = ssub.s32 %s17, %s24
      %p152 = scmp.eq.s32.totalorder %s151, 0
      %s154 = sadd.s32 %s153, 1
      %s155 = scalar_select %p152, %s153, %s154
      %p158 = pneg %p152
      %p159 = scmp.eq.s32.totalorder %s17, 1
      %p160 = por %p158, %p159
      %p161 = scmp.ne.s32.totalorder %s153, %s156
      %p162 = scmp.eq.s32.totalorder %s17, 0
      %p163 = por %p161, %p162
      %p164 = scmp.ne.s32.totalorder %s153, %s156
      %p165 = scmp.eq.s32.totalorder %s22, 1
      %p166 = por %p164, %p165
      %p167 = scmp.ne.s32.totalorder %s156, %s157
      %p168 = scmp.eq.s32.totalorder %s22, 0
      %p169 = por %p167, %p168
      %p170 = scmp.ne.s32.totalorder %s156, %s157
      %p171 = scmp.eq.s32.totalorder %s23, 1
      %p172 = por %p170, %p171
      %p174 = scmp.ne.s32.totalorder %s157, %s173
      %p175 = scmp.eq.s32.totalorder %s23, 0
      %p176 = por %p174, %p175
      %s177 = ssub.s32 %s17, %s24
      %p178 = scmp.eq.s32.totalorder %s177, 0
      %s180 = sadd.s32 %s179, 1
      %s181 = scalar_select %p178, %s179, %s180
      %p184 = pneg %p178
      %p185 = scmp.eq.s32.totalorder %s17, 1
      %p186 = por %p184, %p185
      %p187 = scmp.ne.s32.totalorder %s179, %s182
      %p188 = scmp.eq.s32.totalorder %s17, 0
      %p189 = por %p187, %p188
      %p190 = scmp.ne.s32.totalorder %s179, %s182
      %p191 = scmp.eq.s32.totalorder %s22, 1
      %p192 = por %p190, %p191
      %p193 = scmp.ne.s32.totalorder %s182, %s183
      %p194 = scmp.eq.s32.totalorder %s22, 0
      %p195 = por %p193, %p194
      %p196 = scmp.ne.s32.totalorder %s182, %s183
      %p197 = scmp.eq.s32.totalorder %s23, 1
      %p198 = por %p196, %p197
      %p200 = scmp.ne.s32.totalorder %s183, %s199
      %p201 = scmp.eq.s32.totalorder %s23, 0
      %p202 = por %p200, %p201
      %s203 = ssub.s32 %s17, %s24
      %p204 = scmp.eq.s32.totalorder %s203, 0
      %s206 = sadd.s32 %s205, 1
      %s207 = scalar_select %p204, %s205, %s206
      %p210 = pneg %p204
      %p211 = scmp.eq.s32.totalorder %s17, 1
      %p212 = por %p210, %p211
      %p213 = scmp.ne.s32.totalorder %s205, %s208
      %p214 = scmp.eq.s32.totalorder %s17, 0
      %p215 = por %p213, %p214
      %p216 = scmp.ne.s32.totalorder %s205, %s208
      %p217 = scmp.eq.s32.totalorder %s22, 1
      %p218 = por %p216, %p217
      %p219 = scmp.ne.s32.totalorder %s208, %s209
      %p220 = scmp.eq.s32.totalorder %s22, 0
      %p221 = por %p219, %p220
      %p222 = scmp.ne.s32.totalorder %s208, %s209
      %p223 = scmp.eq.s32.totalorder %s23, 1
      %p224 = por %p222, %p223
      %p226 = scmp.ne.s32.totalorder %s209, %s225
      %p227 = scmp.eq.s32.totalorder %s23, 0
      %p228 = por %p226, %p227
      %p229 = scmp.le.s32.totalorder 1, %s17
      %p230 = scmp.lt.s32.totalorder %s17, 3
      %p231 = pnand %p229, %p230
      %p232 = pneg %p231
      // Predicated region
      $region9: #{tpu_custom_call.1} parent=5 // pred_check
        _
      $region10: #{tpu_custom_call.1} parent=5 // pred_check_branch
        %234 = sbr.rel (%p231) target = $region12
      $region11: #{tpu_custom_call.1} parent=5 // pred_region
        %s235 = ssub.s32 %s17, 1
        // Predicated region
        $region13: #{tpu_custom_call.1} parent=11 // pred_check
          %p236 = pneg %p38
        $region14: #{tpu_custom_call.1} parent=11 // pred_check_branch
          %238 = sbr.rel (%p236) target = $region16
        $region15: #{tpu_custom_call.1} parent=11 // pred_region
          _
        $region16: #{tpu_custom_call.1} parent=11 // pred_fallthru
          _
        // Predicated region
        $region17: #{tpu_custom_call.1} parent=11 // pred_check
          %p239 = pneg %p59
        $region18: #{tpu_custom_call.1} parent=11 // pred_check_branch
          %241 = sbr.rel (%p239) target = $region20
        $region19: #{tpu_custom_call.1} parent=11 // pred_region
          _
        $region20: #{tpu_custom_call.1} parent=11 // pred_fallthru
          _
        // Predicated region
        $region21: #{tpu_custom_call.1} parent=11 // pred_check
          %p242 = pneg %p80
        $region22: #{tpu_custom_call.1} parent=11 // pred_check_branch
          %244 = sbr.rel (%p242) target = $region24
        $region23: #{tpu_custom_call.1} parent=11 // pred_region
          _
        $region24: #{tpu_custom_call.1} parent=11 // pred_fallthru
          _
        // Predicated region
        $region25: #{tpu_custom_call.1} parent=11 // pred_check
          %p245 = pneg %p101
        $region26: #{tpu_custom_call.1} parent=11 // pred_check_branch
          %247 = sbr.rel (%p245) target = $region28
        $region27: #{tpu_custom_call.1} parent=11 // pred_region
          _
        $region28: #{tpu_custom_call.1} parent=11 // pred_fallthru
          _
        // Predicated region
        $region29: #{tpu_custom_call.1} parent=11 // pred_check
          %p248 = pneg %p122
        $region30: #{tpu_custom_call.1} parent=11 // pred_check_branch
          %250 = sbr.rel (%p248) target = $region32
        $region31: #{tpu_custom_call.1} parent=11 // pred_region
          _
        $region32: #{tpu_custom_call.1} parent=11 // pred_fallthru
          _
        // Predicated region
        $region33: #{tpu_custom_call.1} parent=11 // pred_check
          %p251 = pneg %p143
        $region34: #{tpu_custom_call.1} parent=11 // pred_check_branch
          %253 = sbr.rel (%p251) target = $region36
        $region35: #{tpu_custom_call.1} parent=11 // pred_region
          _
        $region36: #{tpu_custom_call.1} parent=11 // pred_fallthru
          _
      $region12: #{tpu_custom_call.1} parent=5 // pred_fallthru
        _
      %p254 = scmp.lt.s32.totalorder %s17, 2
      // Predicated region
      $region37: #{tpu_custom_call.1} parent=5 // pred_check
        %p255 = pneg %p254
      $region38: #{tpu_custom_call.1} parent=5 // pred_check_branch
        %257 = sbr.rel (%p255) target = $region40
      $region39: #{tpu_custom_call.1} parent=5 // pred_region
        // Predicated region
        $region41: #{tpu_custom_call.1} parent=39 // pred_check
          %p258 = pneg %p163
        $region42: #{tpu_custom_call.1} parent=39 // pred_check_branch
          %260 = sbr.rel (%p258) target = $region44
        $region43: #{tpu_custom_call.1} parent=39 // pred_region
          %s261 = smul.u32 8, %s17
          %p262 = scmp.lt.s32.totalorder %s261, 15
          %s263 = scalar_select %p262, %s261, 15
          %s264 = smul.addr %s263, 8
          %s265 = scalar_lea.vmem %s6, %s264
          %s266 = smul.u32 8, %s17
        $region44: #{tpu_custom_call.1} parent=39 // pred_fallthru
          _
        // Predicated region
        $region45: #{tpu_custom_call.1} parent=39 // pred_check
          %p267 = pneg %p189
        $region46: #{tpu_custom_call.1} parent=39 // pred_check_branch
          %269 = sbr.rel (%p267) target = $region48
        $region47: #{tpu_custom_call.1} parent=39 // pred_region
          %s270 = smul.u32 8, %s17
          %p271 = scmp.lt.s32.totalorder %s270, 15
          %s272 = scalar_select %p271, %s270, 15
          %s273 = smul.addr %s272, 8
          %s274 = scalar_lea.vmem %s7, %s273
          %s275 = smul.u32 8, %s17
        $region48: #{tpu_custom_call.1} parent=39 // pred_fallthru
          _
      $region40: #{tpu_custom_call.1} parent=5 // pred_fallthru
        _
      %p276 = scmp.le.s32.totalorder 1, %s17
      %p277 = scmp.lt.s32.totalorder %s17, 3
      %p278 = pnand %p276, %p277
      %p279 = pneg %p278
      // Predicated region
      $region49: #{tpu_custom_call.1} parent=5 // pred_check
        _
      $region50: #{tpu_custom_call.1} parent=5 // pred_check_branch
        %281 = sbr.rel (%p278) target = $region52
      $region51: #{tpu_custom_call.1} parent=5 // pred_region
        %s282 = ssub.s32 %s17, 1
        %p283 = pneg %p38
        %p284 = pneg %p35
        %p285 = pneg %p59
        %p286 = pneg %p56
        %p287 = pneg %p80
        %p288 = pneg %p77
        %p289 = pneg %p101
        %p290 = pneg %p98
        %p291 = pneg %p122
        %p292 = pneg %p119
        %p293 = pneg %p143
        %p294 = pneg %p140
        %s295 = smul.u32 8, %s22
        %p296 = scmp.lt.s32.totalorder %s295, 15
        %s297 = scalar_select %p296, %s295, 15
        %s298 = smul.addr %s297, 8
        %s299 = scalar_lea.vmem %s6, %s298
        %p300 = pneg %p169
        %p301 = pneg %p166
        %s302 = smul.u32 8, %s22
        %p303 = scmp.lt.s32.totalorder %s302, 15
        %s304 = scalar_select %p303, %s302, 15
        %s305 = smul.addr %s304, 8
        %s306 = scalar_lea.vmem %s7, %s305
        %p307 = pneg %p195
        %p308 = pneg %p192
        %p309 = pneg %p221
        %p310 = pneg %p218
        %s311 = sand.u32 %s208, 1
        %s312 = scalar_lea.sflag [#allocation4], %s311
        %s313 = sand.u32 %s208, 1
        %s314 = smul.addr %s313, 4
        %s315 = scalar_lea.vmem [#allocation3], %s314
        %s316 = smul.u32 8, %s22
        %p317 = scmp.lt.s32.totalorder %s316, 15
        %s318 = scalar_select %p317, %s316, 15
        %s319 = smul.addr %s318, 8
        %s320 = scalar_lea.vmem %s6, %s319
        %s321 = smul.u32 8, %s22
        %s322 = smul.u32 8, %s22
        %p323 = scmp.lt.s32.totalorder %s322, 15
        %s324 = scalar_select %p323, %s322, 15
        %s325 = smul.addr %s324, 8
        %s326 = scalar_lea.vmem %s7, %s325
        %s327 = smul.u32 8, %s22
        %v328 = vld [vmem:[%s320] sm:$0xff]
        %v329 = vld [vmem:[%s320 + $0x8] sm:$0xff]
        %v330 = vld [vmem:[%s320 + $0x10] sm:$0xff]
        %v331 = vld [vmem:[%s320 + $0x18] sm:$0xff]
        %v332 = vld [vmem:[%s320 + $0x20] sm:$0xff]
        %v333 = vld [vmem:[%s320 + $0x28] sm:$0xff]
        %v334 = vld [vmem:[%s320 + $0x30] sm:$0xff]
        %v335 = vld [vmem:[%s320 + $0x38] sm:$0xff]
        %v336 = vld [vmem:[%s326] sm:$0xff]
        %v337 = vld [vmem:[%s326 + $0x8] sm:$0xff]
        %v338 = vld [vmem:[%s326 + $0x10] sm:$0xff]
        %v339 = vld [vmem:[%s326 + $0x18] sm:$0xff]
        %v340 = vld [vmem:[%s326 + $0x20] sm:$0xff]
        %v341 = vld [vmem:[%s326 + $0x28] sm:$0xff]
        %v342 = vld [vmem:[%s326 + $0x30] sm:$0xff]
        %v343 = vld [vmem:[%s326 + $0x38] sm:$0xff]
        %v344 = vsub.f32 %v328, %v336
        %v345 = vsub.f32 %v329, %v337
        %v346 = vsub.f32 %v330, %v338
        %v347 = vsub.f32 %v331, %v339
        %v348 = vsub.f32 %v332, %v340
        %v349 = vsub.f32 %v333, %v341
        %v350 = vsub.f32 %v334, %v342
        %v351 = vsub.f32 %v335, %v343
        %v352 = vld [vmem:[%s1] sm:$0xff]
        %v353 = vld [vmem:[%s1 + $0x8] sm:$0xff]
        %vm354 = vcmask 130048
        %v356 = vsel %vm354, %v344, 0
        %v359 = vsel %vm354, %v345, 0
        %v362 = vsel %vm354, %v346, 0
        %v365 = vsel %vm354, %v347, 0
        %v368 = vsel %vm354, %v348, 0
        %v371 = vsel %vm354, %v349, 0
        %v374 = vsel %vm354, %v350, 0
        %v377 = vsel %vm354, %v351, 0
        %379 = vmatprep.subr.mxu0 0.0
        %380 = vmatpush1.msra.mxu0 %v352
        %381 = vmatprep.subr.mxu0 0.0
        %382 = vmatpush1.msra.mxu0 %v353
        %383 = vmatprep.subr.mxu0 0.0
        %384 = vmatpush1.msra.mxu0 0.0
        %385 = vmatprep.subr.mxu0 0.0
        %386 = vmatpush1.msra.mxu0 0.0
        %387 = vmatprep.subr.mxu0 0.0
        %388 = vmatpush1.msra.mxu0 0.0
        %389 = vmatprep.subr.mxu0 0.0
        %390 = vmatpush1.msra.mxu0 0.0
        %391 = vmatprep.subr.mxu0 0.0
        %392 = vmatpush1.msra.mxu0 0.0
        %393 = vmatprep.subr.mxu0 0.0
        %394 = vmatpush1.msra.mxu0 0.0
        %395 = vmatprep.subr.mxu0 0.0
        %396 = vmatpush1.msra.mxu0 0.0
        %397 = vmatprep.subr.mxu0 0.0
        %398 = vmatpush1.msra.mxu0 0.0
        %399 = vmatprep.subr.mxu0 0.0
        %400 = vmatpush1.msra.mxu0 0.0
        %401 = vmatprep.subr.mxu0 0.0
        %402 = vmatpush1.msra.mxu0 0.0
        %403 = vmatprep.subr.mxu0 0.0
        %404 = vmatpush1.msra.mxu0 0.0
        %405 = vmatprep.subr.mxu0 0.0
        %406 = vmatpush1.msra.mxu0 0.0
        %407 = vmatprep.subr.mxu0 0.0
        %408 = vmatpush1.msra.mxu0 0.0
        %409 = vmatprep.subr.mxu0 0.0
        %410 = vmatpush1.msra.mxu0 0.0
        %411 = vmatprep.subr.mxu0 0.0
        %412 = vmatpush1.msra.mxu0 0.0
        %413 = vmatprep.subr.mxu0 0.0
        %414 = vmatpush1.msra.mxu0 0.0
        %415 = vmatprep.subr.mxu0 0.0
        %416 = vmatpush1.msra.mxu0 0.0
        %417 = vmatprep.subr.mxu0 0.0
        %418 = vmatpush1.msra.mxu0 0.0
        %419 = vmatprep.subr.mxu0 0.0
        %420 = vmatpush1.msra.mxu0 0.0
        %421 = vmatprep.subr.mxu0 0.0
        %422 = vmatpush1.msra.mxu0 0.0
        %423 = vmatprep.subr.mxu0 0.0
        %424 = vmatpush1.msra.mxu0 0.0
        %425 = vmatprep.subr.mxu0 0.0
        %426 = vmatpush1.msra.mxu0 0.0
        %427 = vmatprep.subr.mxu0 0.0
        %428 = vmatpush1.msra.mxu0 0.0
        %429 = vmatprep.subr.mxu0 0.0
        %430 = vmatpush1.msra.mxu0 0.0
        %431 = vmatprep.subr.mxu0 0.0
        %432 = vmatpush1.msra.mxu0 0.0
        %433 = vmatprep.subr.mxu0 0.0
        %434 = vmatpush1.msra.mxu0 0.0
        %435 = vmatprep.subr.mxu0 0.0
        %436 = vmatpush1.msra.mxu0 0.0
        %437 = vmatprep.subr.mxu0 0.0
        %438 = vmatpush1.msra.mxu0 0.0
        %439 = vmatprep.subr.mxu0 0.0
        %440 = vmatpush1.msra.mxu0 0.0
        %441 = vmatprep.subr.mxu0 0.0
        %442 = vmatpush1.msra.mxu0 0.0
        %443 = vmatprep.mubr.f32.mxu0 0.0
        %444 = vmatmul.mubr.f32.gmra.mrb[0].mxu0 %v356
        %v445 = vpop.f32.mrb[0].mxu0
        %v446 = vadd.f32 0.0, %v445
        %v447 = vpop.f32.mrb[0].mxu0
        %448 = vmatprep.mubr.f32.mxu0 0.0
        %449 = vmatmul.mubr.f32.gmra.mrb[0].mxu0 %v359
        %v450 = vpop.f32.mrb[0].mxu0
        %v451 = vadd.f32 0.0, %v450
        %v452 = vpop.f32.mrb[0].mxu0
        %453 = vmatprep.mubr.f32.mxu0 0.0
        %454 = vmatmul.mubr.f32.gmra.mrb[0].mxu0 %v362
        %v455 = vpop.f32.mrb[0].mxu0
        %v456 = vadd.f32 0.0, %v455
        %v457 = vpop.f32.mrb[0].mxu0
        %458 = vmatprep.mubr.f32.mxu0 0.0
        %459 = vmatmul.mubr.f32.gmra.mrb[0].mxu0 %v365
        %v460 = vpop.f32.mrb[0].mxu0
        %v461 = vadd.f32 0.0, %v460
        %v462 = vpop.f32.mrb[0].mxu0
        %463 = vmatprep.mubr.f32.mxu0 0.0
        %464 = vmatmul.mubr.f32.gmra.mrb[0].mxu0 %v368
        %v465 = vpop.f32.mrb[0].mxu0
        %v466 = vadd.f32 0.0, %v465
        %v467 = vpop.f32.mrb[0].mxu0
        %468 = vmatprep.mubr.f32.mxu0 0.0
        %469 = vmatmul.mubr.f32.gmra.mrb[0].mxu0 %v371
        %v470 = vpop.f32.mrb[0].mxu0
        %v471 = vadd.f32 0.0, %v470
        %v472 = vpop.f32.mrb[0].mxu0
        %473 = vmatprep.mubr.f32.mxu0 0.0
        %474 = vmatmul.mubr.f32.gmra.mrb[0].mxu0 %v374
        %v475 = vpop.f32.mrb[0].mxu0
        %v476 = vadd.f32 0.0, %v475
        %v477 = vpop.f32.mrb[0].mxu0
        %478 = vmatprep.mubr.f32.mxu0 0.0
        %479 = vmatmul.mubr.f32.gmra.mrb[0].mxu0 %v377
        %v480 = vpop.f32.mrb[0].mxu0
        %v481 = vadd.f32 0.0, %v480
        %v482 = vpop.f32.mrb[0].mxu0
        %483 = vdwg.mxu0
        %vm484 = vcmask 31744
        %485 = vst.msk [vmem:[#allocation2] sm:$0xff] %vm484, %v446
        %486 = vst.msk [vmem:[#allocation2 + $0x8] sm:$0xff] %vm484, %v451
        %487 = vst.msk [vmem:[#allocation2 + $0x10] sm:$0xff] %vm484, %v456
        %488 = vst.msk [vmem:[#allocation2 + $0x18] sm:$0xff] %vm484, %v461
        %489 = vst.msk [vmem:[#allocation2 + $0x20] sm:$0xff] %vm484, %v466
        %490 = vst.msk [vmem:[#allocation2 + $0x28] sm:$0xff] %vm484, %v471
        %491 = vst.msk [vmem:[#allocation2 + $0x30] sm:$0xff] %vm484, %v476
        %492 = vst.msk [vmem:[#allocation2 + $0x38] sm:$0xff] %vm484, %v481
        %v493 = vld [vmem:[%s0] sm:$0xf]
        %v494 = vld [vmem:[%s2] sm:$0xf]
        %v495 = vld [vmem:[%s3] sm:$0xf]
        %v496 = vld [vmem:[%s4] sm:$0xf]
        %v497 = vld [vmem:[%s5] sm:$0xf]
        %v498 = vld [vmem:[#allocation2] sm:$0xff]
        %v499 = vld [vmem:[#allocation2 + $0x8] sm:$0xff]
        %v500 = vld [vmem:[#allocation2 + $0x10] sm:$0xff]
        %v501 = vld [vmem:[#allocation2 + $0x18] sm:$0xff]
        %v502 = vld [vmem:[#allocation2 + $0x20] sm:$0xff]
        %v503 = vld [vmem:[#allocation2 + $0x28] sm:$0xff]
        %v504 = vld [vmem:[#allocation2 + $0x30] sm:$0xff]
        %v505 = vld [vmem:[#allocation2 + $0x38] sm:$0xff]
        %vm506 = vcmask 523264
        %v508 = vsel %vm506, %v493, 0
        %510 = vmatprep.subr.mxu0 0.0
        %511 = vmatpush1.msra.mxu0 %v498
        %512 = vmatprep.subr.mxu0 0.0
        %513 = vmatpush1.msra.mxu0 %v499
        %514 = vmatprep.subr.mxu0 0.0
        %515 = vmatpush1.msra.mxu0 %v500
        %516 = vmatprep.subr.mxu0 0.0
        %517 = vmatpush1.msra.mxu0 %v501
        %518 = vmatprep.subr.mxu0 0.0
        %519 = vmatpush1.msra.mxu0 %v502
        %520 = vmatprep.subr.mxu0 0.0
        %521 = vmatpush1.msra.mxu0 %v503
        %522 = vmatprep.subr.mxu0 0.0
        %523 = vmatpush1.msra.mxu0 %v504
        %524 = vmatprep.subr.mxu0 0.0
        %525 = vmatpush1.msra.mxu0 %v505
        %526 = vmatprep.subr.mxu0 0.0
        %527 = vmatpush1.msra.mxu0 0.0
        %528 = vmatprep.subr.mxu0 0.0
        %529 = vmatpush1.msra.mxu0 0.0
        %530 = vmatprep.subr.mxu0 0.0
        %531 = vmatpush1.msra.mxu0 0.0
        %532 = vmatprep.subr.mxu0 0.0
        %533 = vmatpush1.msra.mxu0 0.0
        %534 = vmatprep.subr.mxu0 0.0
        %535 = vmatpush1.msra.mxu0 0.0
        %536 = vmatprep.subr.mxu0 0.0
        %537 = vmatpush1.msra.mxu0 0.0
        %538 = vmatprep.subr.mxu0 0.0
        %539 = vmatpush1.msra.mxu0 0.0
        %540 = vmatprep.subr.mxu0 0.0
        %541 = vmatpush1.msra.mxu0 0.0
        %542 = vmatprep.subr.mxu0 0.0
        %543 = vmatpush1.msra.mxu0 0.0
        %544 = vmatprep.subr.mxu0 0.0
        %545 = vmatpush1.msra.mxu0 0.0
        %546 = vmatprep.subr.mxu0 0.0
        %547 = vmatpush1.msra.mxu0 0.0
        %548 = vmatprep.subr.mxu0 0.0
        %549 = vmatpush1.msra.mxu0 0.0
        %550 = vmatprep.subr.mxu0 0.0
        %551 = vmatpush1.msra.mxu0 0.0
        %552 = vmatprep.subr.mxu0 0.0
        %553 = vmatpush1.msra.mxu0 0.0
        %554 = vmatprep.subr.mxu0 0.0
        %555 = vmatpush1.msra.mxu0 0.0
        %556 = vmatprep.subr.mxu0 0.0
        %557 = vmatpush1.msra.mxu0 0.0
        %558 = vmatprep.subr.mxu0 0.0
        %559 = vmatpush1.msra.mxu0 0.0
        %560 = vmatprep.subr.mxu0 0.0
        %561 = vmatpush1.msra.mxu0 0.0
        %562 = vmatprep.subr.mxu0 0.0
        %563 = vmatpush1.msra.mxu0 0.0
        %564 = vmatprep.subr.mxu0 0.0
        %565 = vmatpush1.msra.mxu0 0.0
        %566 = vmatprep.subr.mxu0 0.0
        %567 = vmatpush1.msra.mxu0 0.0
        %568 = vmatprep.subr.mxu0 0.0
        %569 = vmatpush1.msra.mxu0 0.0
        %570 = vmatprep.subr.mxu0 0.0
        %571 = vmatpush1.msra.mxu0 0.0
        %572 = vmatprep.subr.mxu0 0.0
        %573 = vmatpush1.msra.mxu0 0.0
        %574 = vmatprep.mubr.f32.mxu0 0.0
        %575 = vmatmul.mubr.f32.gmra.mrb[0].mxu0 %v508
        %v576 = vpop.f32.mrb[0].mxu0
        %v577 = vadd.f32 0.0, %v576
        %v578 = vpop.f32.mrb[0].mxu0
        %579 = vdwg.mxu0
        %v581 = vsel %vm484, %v577, 0
        %vm583 = vcmask 1043456
        %v585 = vsel %vm583, %v494, 0
        %587 = vmatprep.subr.mxu0 0.0
        %588 = vmatpush1.msra.mxu0 %v585
        %589 = vmatprep.subr.mxu0 0.0
        %590 = vmatpush1.msra.mxu0 0.0
        %591 = vmatprep.subr.mxu0 0.0
        %592 = vmatpush1.msra.mxu0 0.0
        %593 = vmatprep.subr.mxu0 0.0
        %594 = vmatpush1.msra.mxu0 0.0
        %595 = vmatprep.subr.mxu0 0.0
        %596 = vmatpush1.msra.mxu0 0.0
        %597 = vmatprep.subr.mxu0 0.0
        %598 = vmatpush1.msra.mxu0 0.0
        %599 = vmatprep.subr.mxu0 0.0
        %600 = vmatpush1.msra.mxu0 0.0
        %601 = vmatprep.subr.mxu0 0.0
        %602 = vmatpush1.msra.mxu0 0.0
        %603 = vmatprep.subr.mxu0 0.0
        %604 = vmatpush1.msra.mxu0 0.0
        %605 = vmatprep.subr.mxu0 0.0
        %606 = vmatpush1.msra.mxu0 0.0
        %607 = vmatprep.subr.mxu0 0.0
        %608 = vmatpush1.msra.mxu0 0.0
        %609 = vmatprep.subr.mxu0 0.0
        %610 = vmatpush1.msra.mxu0 0.0
        %611 = vmatprep.subr.mxu0 0.0
        %612 = vmatpush1.msra.mxu0 0.0
        %613 = vmatprep.subr.mxu0 0.0
        %614 = vmatpush1.msra.mxu0 0.0
        %615 = vmatprep.subr.mxu0 0.0
        %616 = vmatpush1.msra.mxu0 0.0
        %617 = vmatprep.subr.mxu0 0.0
        %618 = vmatpush1.msra.mxu0 0.0
        %619 = vmatprep.subr.mxu0 0.0
        %620 = vmatpush1.msra.mxu0 0.0
        %621 = vmatprep.subr.mxu0 0.0
        %622 = vmatpush1.msra.mxu0 0.0
        %623 = vmatprep.subr.mxu0 0.0
        %624 = vmatpush1.msra.mxu0 0.0
        %625 = vmatprep.subr.mxu0 0.0
        %626 = vmatpush1.msra.mxu0 0.0
        %627 = vmatprep.subr.mxu0 0.0
        %628 = vmatpush1.msra.mxu0 0.0
        %629 = vmatprep.subr.mxu0 0.0
        %630 = vmatpush1.msra.mxu0 0.0
        %631 = vmatprep.subr.mxu0 0.0
        %632 = vmatpush1.msra.mxu0 0.0
        %633 = vmatprep.subr.mxu0 0.0
        %634 = vmatpush1.msra.mxu0 0.0
        %635 = vmatprep.subr.mxu0 0.0
        %636 = vmatpush1.msra.mxu0 0.0
        %637 = vmatprep.subr.mxu0 0.0
        %638 = vmatpush1.msra.mxu0 0.0
        %639 = vmatprep.subr.mxu0 0.0
        %640 = vmatpush1.msra.mxu0 0.0
        %641 = vmatprep.subr.mxu0 0.0
        %642 = vmatpush1.msra.mxu0 0.0
        %643 = vmatprep.subr.mxu0 0.0
        %644 = vmatpush1.msra.mxu0 0.0
        %645 = vmatprep.subr.mxu0 0.0
        %646 = vmatpush1.msra.mxu0 0.0
        %647 = vmatprep.subr.mxu0 0.0
        %648 = vmatpush1.msra.mxu0 0.0
        %649 = vmatprep.subr.mxu0 0.0
        %650 = vmatpush1.msra.mxu0 0.0
        %651 = vmatprep.mubr.f32.mxu0 0.0
        %652 = vmatmul.mubr.f32.gmra.mrb[0].mxu0 %v581
        %v653 = vpop.f32.mrb[0].mxu0
        %v654 = vadd.f32 0.0, %v653
        %v655 = vpop.f32.mrb[0].mxu0
        %656 = vdwg.mxu0
        %v658 = vsel %vm583, %v495, 0
        %660 = vmatprep.subr.mxu0 0.0
        %661 = vmatpush1.msra.mxu0 %v658
        %662 = vmatprep.subr.mxu0 0.0
        %663 = vmatpush1.msra.mxu0 0.0
        %664 = vmatprep.subr.mxu0 0.0
        %665 = vmatpush1.msra.mxu0 0.0
        %666 = vmatprep.subr.mxu0 0.0
        %667 = vmatpush1.msra.mxu0 0.0
        %668 = vmatprep.subr.mxu0 0.0
        %669 = vmatpush1.msra.mxu0 0.0
        %670 = vmatprep.subr.mxu0 0.0
        %671 = vmatpush1.msra.mxu0 0.0
        %672 = vmatprep.subr.mxu0 0.0
        %673 = vmatpush1.msra.mxu0 0.0
        %674 = vmatprep.subr.mxu0 0.0
        %675 = vmatpush1.msra.mxu0 0.0
        %676 = vmatprep.subr.mxu0 0.0
        %677 = vmatpush1.msra.mxu0 0.0
        %678 = vmatprep.subr.mxu0 0.0
        %679 = vmatpush1.msra.mxu0 0.0
        %680 = vmatprep.subr.mxu0 0.0
        %681 = vmatpush1.msra.mxu0 0.0
        %682 = vmatprep.subr.mxu0 0.0
        %683 = vmatpush1.msra.mxu0 0.0
        %684 = vmatprep.subr.mxu0 0.0
        %685 = vmatpush1.msra.mxu0 0.0
        %686 = vmatprep.subr.mxu0 0.0
        %687 = vmatpush1.msra.mxu0 0.0
        %688 = vmatprep.subr.mxu0 0.0
        %689 = vmatpush1.msra.mxu0 0.0
        %690 = vmatprep.subr.mxu0 0.0
        %691 = vmatpush1.msra.mxu0 0.0
        %692 = vmatprep.subr.mxu0 0.0
        %693 = vmatpush1.msra.mxu0 0.0
        %694 = vmatprep.subr.mxu0 0.0
        %695 = vmatpush1.msra.mxu0 0.0
        %696 = vmatprep.subr.mxu0 0.0
        %697 = vmatpush1.msra.mxu0 0.0
        %698 = vmatprep.subr.mxu0 0.0
        %699 = vmatpush1.msra.mxu0 0.0
        %700 = vmatprep.subr.mxu0 0.0
        %701 = vmatpush1.msra.mxu0 0.0
        %702 = vmatprep.subr.mxu0 0.0
        %703 = vmatpush1.msra.mxu0 0.0
        %704 = vmatprep.subr.mxu0 0.0
        %705 = vmatpush1.msra.mxu0 0.0
        %706 = vmatprep.subr.mxu0 0.0
        %707 = vmatpush1.msra.mxu0 0.0
        %708 = vmatprep.subr.mxu0 0.0
        %709 = vmatpush1.msra.mxu0 0.0
        %710 = vmatprep.subr.mxu0 0.0
        %711 = vmatpush1.msra.mxu0 0.0
        %712 = vmatprep.subr.mxu0 0.0
        %713 = vmatpush1.msra.mxu0 0.0
        %714 = vmatprep.subr.mxu0 0.0
        %715 = vmatpush1.msra.mxu0 0.0
        %716 = vmatprep.subr.mxu0 0.0
        %717 = vmatpush1.msra.mxu0 0.0
        %718 = vmatprep.subr.mxu0 0.0
        %719 = vmatpush1.msra.mxu0 0.0
        %720 = vmatprep.subr.mxu0 0.0
        %721 = vmatpush1.msra.mxu0 0.0
        %722 = vmatprep.subr.mxu0 0.0
        %723 = vmatpush1.msra.mxu0 0.0
        %724 = vmatprep.mubr.f32.mxu0 0.0
        %725 = vmatmul.mubr.f32.gmra.mrb[0].mxu0 %v581
        %v726 = vpop.f32.mrb[0].mxu0
        %v727 = vadd.f32 0.0, %v726
        %v728 = vpop.f32.mrb[0].mxu0
        %729 = vdwg.mxu0
        %v731 = vsel %vm484, %v496, 0
        %v733 = vsel %vm583, %v577, 0
        %735 = vmatprep.subr.mxu0 0.0
        %736 = vmatpush1.msra.mxu0 %v733
        %737 = vmatprep.subr.mxu0 0.0
        %738 = vmatpush1.msra.mxu0 0.0
        %739 = vmatprep.subr.mxu0 0.0
        %740 = vmatpush1.msra.mxu0 0.0
        %741 = vmatprep.subr.mxu0 0.0
        %742 = vmatpush1.msra.mxu0 0.0
        %743 = vmatprep.subr.mxu0 0.0
        %744 = vmatpush1.msra.mxu0 0.0
        %745 = vmatprep.subr.mxu0 0.0
        %746 = vmatpush1.msra.mxu0 0.0
        %747 = vmatprep.subr.mxu0 0.0
        %748 = vmatpush1.msra.mxu0 0.0
        %749 = vmatprep.subr.mxu0 0.0
        %750 = vmatpush1.msra.mxu0 0.0
        %751 = vmatprep.subr.mxu0 0.0
        %752 = vmatpush1.msra.mxu0 0.0
        %753 = vmatprep.subr.mxu0 0.0
        %754 = vmatpush1.msra.mxu0 0.0
        %755 = vmatprep.subr.mxu0 0.0
        %756 = vmatpush1.msra.mxu0 0.0
        %757 = vmatprep.subr.mxu0 0.0
        %758 = vmatpush1.msra.mxu0 0.0
        %759 = vmatprep.subr.mxu0 0.0
        %760 = vmatpush1.msra.mxu0 0.0
        %761 = vmatprep.subr.mxu0 0.0
        %762 = vmatpush1.msra.mxu0 0.0
        %763 = vmatprep.subr.mxu0 0.0
        %764 = vmatpush1.msra.mxu0 0.0
        %765 = vmatprep.subr.mxu0 0.0
        %766 = vmatpush1.msra.mxu0 0.0
        %767 = vmatprep.subr.mxu0 0.0
        %768 = vmatpush1.msra.mxu0 0.0
        %769 = vmatprep.subr.mxu0 0.0
        %770 = vmatpush1.msra.mxu0 0.0
        %771 = vmatprep.subr.mxu0 0.0
        %772 = vmatpush1.msra.mxu0 0.0
        %773 = vmatprep.subr.mxu0 0.0
        %774 = vmatpush1.msra.mxu0 0.0
        %775 = vmatprep.subr.mxu0 0.0
        %776 = vmatpush1.msra.mxu0 0.0
        %777 = vmatprep.subr.mxu0 0.0
        %778 = vmatpush1.msra.mxu0 0.0
        %779 = vmatprep.subr.mxu0 0.0
        %780 = vmatpush1.msra.mxu0 0.0
        %781 = vmatprep.subr.mxu0 0.0
        %782 = vmatpush1.msra.mxu0 0.0
        %783 = vmatprep.subr.mxu0 0.0
        %784 = vmatpush1.msra.mxu0 0.0
        %785 = vmatprep.subr.mxu0 0.0
        %786 = vmatpush1.msra.mxu0 0.0
        %787 = vmatprep.subr.mxu0 0.0
        %788 = vmatpush1.msra.mxu0 0.0
        %789 = vmatprep.subr.mxu0 0.0
        %790 = vmatpush1.msra.mxu0 0.0
        %791 = vmatprep.subr.mxu0 0.0
        %792 = vmatpush1.msra.mxu0 0.0
        %793 = vmatprep.subr.mxu0 0.0
        %794 = vmatpush1.msra.mxu0 0.0
        %795 = vmatprep.subr.mxu0 0.0
        %796 = vmatpush1.msra.mxu0 0.0
        %797 = vmatprep.subr.mxu0 0.0
        %798 = vmatpush1.msra.mxu0 0.0
        %799 = vmatprep.mubr.f32.mxu0 0.0
        %800 = vmatmul.mubr.f32.gmra.mrb[0].mxu0 %v731
        %v801 = vpop.f32.mrb[0].mxu0
        %v802 = vadd.f32 0.0, %v801
        %v803 = vpop.f32.mrb[0].mxu0
        %804 = vdwg.mxu0
        %v806 = vsel %vm484, %v497, 0
        %808 = vmatprep.subr.mxu0 0.0
        %809 = vmatpush1.msra.mxu0 %v733
        %810 = vmatprep.subr.mxu0 0.0
        %811 = vmatpush1.msra.mxu0 0.0
        %812 = vmatprep.subr.mxu0 0.0
        %813 = vmatpush1.msra.mxu0 0.0
        %814 = vmatprep.subr.mxu0 0.0
        %815 = vmatpush1.msra.mxu0 0.0
        %816 = vmatprep.subr.mxu0 0.0
        %817 = vmatpush1.msra.mxu0 0.0
        %818 = vmatprep.subr.mxu0 0.0
        %819 = vmatpush1.msra.mxu0 0.0
        %820 = vmatprep.subr.mxu0 0.0
        %821 = vmatpush1.msra.mxu0 0.0
        %822 = vmatprep.subr.mxu0 0.0
        %823 = vmatpush1.msra.mxu0 0.0
        %824 = vmatprep.subr.mxu0 0.0
        %825 = vmatpush1.msra.mxu0 0.0
        %826 = vmatprep.subr.mxu0 0.0
        %827 = vmatpush1.msra.mxu0 0.0
        %828 = vmatprep.subr.mxu0 0.0
        %829 = vmatpush1.msra.mxu0 0.0
        %830 = vmatprep.subr.mxu0 0.0
        %831 = vmatpush1.msra.mxu0 0.0
        %832 = vmatprep.subr.mxu0 0.0
        %833 = vmatpush1.msra.mxu0 0.0
        %834 = vmatprep.subr.mxu0 0.0
        %835 = vmatpush1.msra.mxu0 0.0
        %836 = vmatprep.subr.mxu0 0.0
        %837 = vmatpush1.msra.mxu0 0.0
        %838 = vmatprep.subr.mxu0 0.0
        %839 = vmatpush1.msra.mxu0 0.0
        %840 = vmatprep.subr.mxu0 0.0
        %841 = vmatpush1.msra.mxu0 0.0
        %842 = vmatprep.subr.mxu0 0.0
        %843 = vmatpush1.msra.mxu0 0.0
        %844 = vmatprep.subr.mxu0 0.0
        %845 = vmatpush1.msra.mxu0 0.0
        %846 = vmatprep.subr.mxu0 0.0
        %847 = vmatpush1.msra.mxu0 0.0
        %848 = vmatprep.subr.mxu0 0.0
        %849 = vmatpush1.msra.mxu0 0.0
        %850 = vmatprep.subr.mxu0 0.0
        %851 = vmatpush1.msra.mxu0 0.0
        %852 = vmatprep.subr.mxu0 0.0
        %853 = vmatpush1.msra.mxu0 0.0
        %854 = vmatprep.subr.mxu0 0.0
        %855 = vmatpush1.msra.mxu0 0.0
        %856 = vmatprep.subr.mxu0 0.0
        %857 = vmatpush1.msra.mxu0 0.0
        %858 = vmatprep.subr.mxu0 0.0
        %859 = vmatpush1.msra.mxu0 0.0
        %860 = vmatprep.subr.mxu0 0.0
        %861 = vmatpush1.msra.mxu0 0.0
        %862 = vmatprep.subr.mxu0 0.0
        %863 = vmatpush1.msra.mxu0 0.0
        %864 = vmatprep.subr.mxu0 0.0
        %865 = vmatpush1.msra.mxu0 0.0
        %866 = vmatprep.subr.mxu0 0.0
        %867 = vmatpush1.msra.mxu0 0.0
        %868 = vmatprep.subr.mxu0 0.0
        %869 = vmatpush1.msra.mxu0 0.0
        %870 = vmatprep.subr.mxu0 0.0
        %871 = vmatpush1.msra.mxu0 0.0
        %872 = vmatprep.mubr.f32.mxu0 0.0
        %873 = vmatmul.mubr.f32.gmra.mrb[0].mxu0 %v806
        %v874 = vpop.f32.mrb[0].mxu0
        %v875 = vadd.f32 0.0, %v874
        %v876 = vpop.f32.mrb[0].mxu0
        %877 = vdwg.mxu0
        %v878 = vmul.f32 %v654, %v654
        %v879 = vmul.f32 %v727, %v727
        %v880 = vadd.f32 %v878, %v879
        %v881 = vmul.f32 %v802, %v802
        %v882 = vadd.f32 %v880, %v881
        %v883 = vmul.f32 %v875, %v875
        %v884 = vadd.f32 %v882, %v883
        %vm885 = vcmask 27648
        %886 = vst.msk [vmem:[%s315] sm:$0xf] %vm885, %v884
        %s887 = sand.u32 %s208, 1
        %s888 = scalar_lea.sflag [#allocation4], %s887
        %s889 = sand.u32 %s208, 1
        %s890 = smul.addr %s889, 4
        %s891 = scalar_lea.vmem [#allocation3], %s890
        // Predicated region
        $region53: #{tpu_custom_call.1} parent=51 // pred_check
          %p892 = pneg %p218
        $region54: #{tpu_custom_call.1} parent=51 // pred_check_branch
          %894 = sbr.rel (%p892) target = $region56
        $region55: #{tpu_custom_call.1} parent=51 // pred_region
          %s896 = ssub.s32 64, 64
          %897 = vsyncadd %s888, %s896
          %s898 = smul.addr %s22, 64
          %s899 = scalar_lea.hbm %s8, %s898
          %s901 = sshll.u32 %s891, 4
          %s902 = int_to_ptr.vmem [resolvable:$true] %s901
          %904 = dma.vmem_to_hbm [thread:$0]  %s902, 64, %s899, %s888
        $region56: #{tpu_custom_call.1} parent=51 // pred_fallthru
          _
      $region52: #{tpu_custom_call.1} parent=5 // pred_fallthru
        _
      %p905 = scmp.le.s32.totalorder 2, %s17
      // Predicated region
      $region57: #{tpu_custom_call.1} parent=5 // pred_check
        %p906 = pneg %p905
      $region58: #{tpu_custom_call.1} parent=5 // pred_check_branch
        %908 = sbr.rel (%p906) target = $region60
      $region59: #{tpu_custom_call.1} parent=5 // pred_region
        %s909 = ssub.s32 %s17, 2
        // Predicated region
        $region61: #{tpu_custom_call.1} parent=59 // pred_check
          %p910 = pneg %p224
        $region62: #{tpu_custom_call.1} parent=59 // pred_check_branch
          %912 = sbr.rel (%p910) target = $region64
        $region63: #{tpu_custom_call.1} parent=59 // pred_region
          %s913 = sand.u32 %s209, 1
          %s914 = scalar_lea.sflag [#allocation4], %s913
          %s915 = sand.u32 %s209, 1
          %s916 = smul.addr %s915, 4
          %s917 = scalar_lea.vmem [#allocation3], %s916
          %918 = dma.done %s914, 64
        $region64: #{tpu_custom_call.1} parent=59 // pred_fallthru
          _
      $region60: #{tpu_custom_call.1} parent=5 // pred_fallthru
        _
    $region6: #{tpu_custom_call.1} parent=1 // loop_footer
      %s21 = sadd.s32 1, %s17
    $region7: #{tpu_custom_call.1} parent=1 // loop_footer_branch
      %16 = sbr.rel target = $region3
    $region8: #{tpu_custom_call.1} parent=1 // loop_exit
      _
    %919 = vsyncpa [#allocation4], 1
    %s920 = scalar_lea.sflag [#allocation4], 1
    %921 = vsyncpa %s920, 1

</llo_original>
